<compile_context>
chip_gen: v6e
topology: v6e:2x2x1
jax: 0.10.0
libtpu: 0.0.40
codegen_flags: <defaults>
</compile_context>

<pallas_src>
import functools

import jax
import jax.numpy as jnp
from jax.experimental import pallas as pl
from jax.experimental.pallas import tpu as pltpu

# The reference module uses a global EPS (not shown in the snippet); fixed here.
EPS = 1e-6

LANES = 128        # lane width
TILE_R_MAX = 1024  # max rows per tile: 1024x128 f32 = 512 KiB per input block
NUM_CORES = 2      # leading 'parallel' axis for v7x megacore (no-op on 1 TC)


def _f1_partial_kernel(p_ref, g_ref, tp_ref, sp_ref, sg_ref, *,
                       rows, tile_r, tiles_per_core, need_mask):
    """Accumulates element-wise partials TP, sum(P), sum(G) per core.

    tp/sp/sg output blocks are indexed only by the 'parallel' core axis, so they
    stay VMEM-resident across the inner 'arbitrary' tile loop (accumulators).
    """
    c = pl.program_id(0)
    i = pl.program_id(1)

    @pl.when(i == 0)
    def _():
        tp_ref[...] = jnp.zeros_like(tp_ref)
        sp_ref[...] = jnp.zeros_like(sp_ref)
        sg_ref[...] = jnp.zeros_like(sg_ref)

    p = p_ref[...].astype(jnp.float32)
    g = g_ref[...].astype(jnp.float32)

    if need_mask:
        # Last tile(s) may extend past the real data (out-of-bounds reads give
        # garbage); zero them out based on the logical global row index.
        row0 = (c * tiles_per_core + i) * tile_r
        row_ids = row0 + jax.lax.broadcasted_iota(jnp.int32, (tile_r, LANES), 0)
        valid = row_ids < rows
        p = jnp.where(valid, p, 0.0)
        g = jnp.where(valid, g, 0.0)

    tp_ref[...] += p * g   # TP partials
    sp_ref[...] += p       # sum(P) partials  (FP = Sp - TP later)
    sg_ref[...] += g       # sum(G) partials  (FN = Sg - TP later)


def f1_pallas(P, G):
    """Precision * Recall / (Precision + Recall + EPS) over all elements."""
    assert P.shape == G.shape
    p_flat = P.reshape(-1)
    g_flat = G.reshape(-1)
    n = p_flat.shape[0]

    rows = n // LANES
    tail = n - rows * LANES

    zero = jnp.zeros((), jnp.float32)
    if rows == 0:
        # Tiny input (< 128 elements): pad the tiny array to one lane row.
        pad = LANES - n
        p_main = jnp.pad(p_flat, (0, pad)).reshape(1, LANES)
        g_main = jnp.pad(g_flat, (0, pad)).reshape(1, LANES)
        rows = 1
        tail_tp = tail_sp = tail_sg = zero
    else:
        # Native dtype straight through -- cast happens inside the kernel.
        p_main = p_flat[: rows * LANES].reshape(rows, LANES)
        g_main = g_flat[: rows * LANES].reshape(rows, LANES)
        if tail > 0:
            # < 128 leftover elements: trivial JAX epilogue (no full-array pad).
            p_t = p_flat[rows * LANES:].astype(jnp.float32)
            g_t = g_flat[rows * LANES:].astype(jnp.float32)
            tail_tp = jnp.sum(p_t * g_t)
            tail_sp = jnp.sum(p_t)
            tail_sg = jnp.sum(g_t)
        else:
            tail_tp = tail_sp = tail_sg = zero

    # Tile either the whole thing (small inputs: block == full array, allowed)
    # or TILE_R_MAX rows (divisible by 8) with in-kernel masking of the ragged
    # last tile.
    tile_r = rows if rows <= TILE_R_MAX else TILE_R_MAX
    num_tiles = (rows + tile_r - 1) // tile_r
    cores = min(NUM_CORES, num_tiles)
    tiles_per_core = (num_tiles + cores - 1) // cores
    need_mask = (cores * tiles_per_core * tile_r) != rows

    def in_map(c, i):
        # Clamp so over-allocated (fully out-of-range) steps just re-read the
        # last tile; their contribution is zeroed by the in-kernel mask.
        return (jnp.minimum(c * tiles_per_core + i, num_tiles - 1), 0)

    def out_map(c, i):
        return (c, 0)

    acc_shape = jax.ShapeDtypeStruct((cores * tile_r, LANES), jnp.float32)
    acc_spec = pl.BlockSpec((tile_r, LANES), out_map)

    kernel = functools.partial(
        _f1_partial_kernel,
        rows=rows, tile_r=tile_r, tiles_per_core=tiles_per_core,
        need_mask=need_mask)

    tp_acc, sp_acc, sg_acc = pl.pallas_call(
        kernel,
        out_shape=(acc_shape, acc_shape, acc_shape),
        grid_spec=pltpu.PrefetchScalarGridSpec(
            num_scalar_prefetch=0,
            grid=(cores, tiles_per_core),
            in_specs=[pl.BlockSpec((tile_r, LANES), in_map),
                      pl.BlockSpec((tile_r, LANES), in_map)],
            out_specs=(acc_spec, acc_spec, acc_spec),
        ),
        compiler_params=pltpu.CompilerParams(
            dimension_semantics=("parallel", "arbitrary")),
    )(p_main, g_main)

    # Final (tiny) tree reduction + scalar F1 math in plain JAX, combining the
    # per-core vector partials and the <128-element tail epilogue.
    tp = jnp.sum(tp_acc) + tail_tp
    sp = jnp.sum(sp_acc) + tail_sp
    sg = jnp.sum(sg_acc) + tail_sg

    fp = sp - tp
    fn = sg - tp
    precision = tp / (tp + fp + EPS)
    recall = tp / (tp + fn + EPS)
    return precision * recall / (precision + recall + EPS)


def f1_ref(P, G):
    P = P.astype(jnp.float32)
    G = G.astype(jnp.float32)
    tp = jnp.sum(P * G)
    fp = jnp.sum(P * (1.0 - G))
    fn = jnp.sum((1.0 - P) * G)
    precision = tp / (tp + fp + EPS)
    recall = tp / (tp + fn + EPS)
    return precision * recall / (precision + recall + EPS)


if __name__ == "__main__":
    key = jax.random.PRNGKey(0)
    k1, k2 = jax.random.split(key)
    # Predictions in [0, 1] and binary ground-truth mask, NCHW-like shapes.
    P = jax.random.uniform(k1, (2, 4, 16, 16), dtype=jnp.float32)
    G = (jax.random.uniform(k2, (2, 4, 16, 16), dtype=jnp.float32) > 0.5
         ).astype(jnp.float32)

    out = f1_pallas(P, G)
    out = jax.block_until_ready(out)

    ref = f1_ref(P, G)
    assert jnp.allclose(out, ref, rtol=1e-5, atol=1e-6), (out, ref)
    print("KERNEL_OK")
</pallas_src>

<mosaic_0001>
module attributes {stable_mosaic.version = 11 : i64} {
  func.func @_f1_partial_kernel(%arg0: i32, %arg1: i32, %arg2: memref<16x128xf32, #tpu.memory_space<vmem>>, %arg3: memref<16x128xf32, #tpu.memory_space<vmem>>, %arg4: memref<16x128xf32, #tpu.memory_space<vmem>>, %arg5: memref<16x128xf32, #tpu.memory_space<vmem>>, %arg6: memref<16x128xf32, #tpu.memory_space<vmem>>) attributes {dimension_semantics = [#tpu.dimension_semantics<parallel>, #tpu.dimension_semantics<arbitrary>], iteration_bounds = array<i64: 1, 1>, scalar_prefetch = 0 : i64, scratch_operands = 0 : i64, tpu.core_type = #tpu.core_type<tc>, window_params = [{transform_indices = @transform_0, window_bounds = array<i64: 16, 128>}, {transform_indices = @transform_1, window_bounds = array<i64: 16, 128>}, {transform_indices = @transform_2, window_bounds = array<i64: 16, 128>}, {transform_indices = @transform_3, window_bounds = array<i64: 16, 128>}, {transform_indices = @transform_4, window_bounds = array<i64: 16, 128>}]} {
    %c0_i32 = arith.constant 0 : i32
    %0 = arith.cmpi eq, %arg1, %c0_i32 : i32
    %1 = arith.extui %0 : i1 to i32
    %c0_i32_0 = arith.constant 0 : i32
    %2 = arith.cmpi ne, %1, %c0_i32_0 : i32
    scf.if %2 {
      %cst = arith.constant 0.000000e+00 : f32
      %15 = vector.broadcast %cst : f32 to vector<16x128xf32>
      %c0_16 = arith.constant 0 : index
      %c0_17 = arith.constant 0 : index
      %16 = vector.load %arg4[%c0_16, %c0_17] : memref<16x128xf32, #tpu.memory_space<vmem>>, vector<16x128xf32>
      tpu.vector_store %arg4[%c0_16, %c0_17], %15 {strides = array<i32>} : memref<16x128xf32, #tpu.memory_space<vmem>>, vector<16x128xf32>,
      %cst_18 = arith.constant 0.000000e+00 : f32
      %17 = vector.broadcast %cst_18 : f32 to vector<16x128xf32>
      %c0_19 = arith.constant 0 : index
      %c0_20 = arith.constant 0 : index
      %18 = vector.load %arg5[%c0_19, %c0_20] : memref<16x128xf32, #tpu.memory_space<vmem>>, vector<16x128xf32>
      tpu.vector_store %arg5[%c0_19, %c0_20], %17 {strides = array<i32>} : memref<16x128xf32, #tpu.memory_space<vmem>>, vector<16x128xf32>,
      %cst_21 = arith.constant 0.000000e+00 : f32
      %19 = vector.broadcast %cst_21 : f32 to vector<16x128xf32>
      %c0_22 = arith.constant 0 : index
      %c0_23 = arith.constant 0 : index
      %20 = vector.load %arg6[%c0_22, %c0_23] : memref<16x128xf32, #tpu.memory_space<vmem>>, vector<16x128xf32>
      tpu.vector_store %arg6[%c0_22, %c0_23], %19 {strides = array<i32>} : memref<16x128xf32, #tpu.memory_space<vmem>>, vector<16x128xf32>,
    } else {
    }
    %c0 = arith.constant 0 : index
    %c0_1 = arith.constant 0 : index
    %3 = vector.load %arg2[%c0, %c0_1] : memref<16x128xf32, #tpu.memory_space<vmem>>, vector<16x128xf32>
    %c0_2 = arith.constant 0 : index
    %c0_3 = arith.constant 0 : index
    %4 = vector.load %arg3[%c0_2, %c0_3] : memref<16x128xf32, #tpu.memory_space<vmem>>, vector<16x128xf32>
    %c0_4 = arith.constant 0 : index
    %c0_5 = arith.constant 0 : index
    %5 = vector.load %arg4[%c0_4, %c0_5] : memref<16x128xf32, #tpu.memory_space<vmem>>, vector<16x128xf32>
    %6 = arith.mulf %3, %4 : vector<16x128xf32>
    %7 = arith.addf %5, %6 : vector<16x128xf32>
    %c0_6 = arith.constant 0 : index
    %c0_7 = arith.constant 0 : index
    %8 = vector.load %arg4[%c0_6, %c0_7] : memref<16x128xf32, #tpu.memory_space<vmem>>, vector<16x128xf32>
    tpu.vector_store %arg4[%c0_6, %c0_7], %7 {strides = array<i32>} : memref<16x128xf32, #tpu.memory_space<vmem>>, vector<16x128xf32>,
    %c0_8 = arith.constant 0 : index
    %c0_9 = arith.constant 0 : index
    %9 = vector.load %arg5[%c0_8, %c0_9] : memref<16x128xf32, #tpu.memory_space<vmem>>, vector<16x128xf32>
    %10 = arith.addf %9, %3 : vector<16x128xf32>
    %c0_10 = arith.constant 0 : index
    %c0_11 = arith.constant 0 : index
    %11 = vector.load %arg5[%c0_10, %c0_11] : memref<16x128xf32, #tpu.memory_space<vmem>>, vector<16x128xf32>
    tpu.vector_store %arg5[%c0_10, %c0_11], %10 {strides = array<i32>} : memref<16x128xf32, #tpu.memory_space<vmem>>, vector<16x128xf32>,
    %c0_12 = arith.constant 0 : index
    %c0_13 = arith.constant 0 : index
    %12 = vector.load %arg6[%c0_12, %c0_13] : memref<16x128xf32, #tpu.memory_space<vmem>>, vector<16x128xf32>
    %13 = arith.addf %12, %4 : vector<16x128xf32>
    %c0_14 = arith.constant 0 : index
    %c0_15 = arith.constant 0 : index
    %14 = vector.load %arg6[%c0_14, %c0_15] : memref<16x128xf32, #tpu.memory_space<vmem>>, vector<16x128xf32>
    tpu.vector_store %arg6[%c0_14, %c0_15], %13 {strides = array<i32>} : memref<16x128xf32, #tpu.memory_space<vmem>>, vector<16x128xf32>,
    return
  }
  func.func @transform_0(%arg0: i32, %arg1: i32) -> (i32, i32) {
    %c1_i32 = arith.constant 1 : i32
    %0 = arith.muli %arg0, %c1_i32 : i32
    %1 = arith.addi %0, %arg1 : i32
    %c0_i32 = arith.constant 0 : i32
    %2 = arith.minsi %1, %c0_i32 : i32
    %c0_i32_0 = arith.constant 0 : i32
    %c0_i32_1 = arith.constant 0 : i32
    return %2, %c0_i32_0 : i32, i32
  }
  func.func @transform_1(%arg0: i32, %arg1: i32) -> (i32, i32) {
    %c1_i32 = arith.constant 1 : i32
    %0 = arith.muli %arg0, %c1_i32 : i32
    %1 = arith.addi %0, %arg1 : i32
    %c0_i32 = arith.constant 0 : i32
    %2 = arith.minsi %1, %c0_i32 : i32
    %c0_i32_0 = arith.constant 0 : i32
    %c0_i32_1 = arith.constant 0 : i32
    return %2, %c0_i32_0 : i32, i32
  }
  func.func @transform_2(%arg0: i32, %arg1: i32) -> (i32, i32) {
    %c0_i32 = arith.constant 0 : i32
    %c0_i32_0 = arith.constant 0 : i32
    return %arg0, %c0_i32 : i32, i32
  }
  func.func @transform_3(%arg0: i32, %arg1: i32) -> (i32, i32) {
    %c0_i32 = arith.constant 0 : i32
    %c0_i32_0 = arith.constant 0 : i32
    return %arg0, %c0_i32 : i32, i32
  }
  func.func @transform_4(%arg0: i32, %arg1: i32) -> (i32, i32) {
    %c0_i32 = arith.constant 0 : i32
    %c0_i32_0 = arith.constant 0 : i32
    return %arg0, %c0_i32 : i32, i32
  }
}

</mosaic_0001>

<llo_original>
// kernel: tpu_custom_call.1
$region0: #{tpu_custom_call.1}
  #allocation0 [shape = 'u32[]', space=smem, size = 0x4, offset = 0x4, fixed_abs, tag = 'smem constant byte address 0x4 - core index']
  #allocation1 [shape = 'u32[144,128]{1,0:T(1,128)}', space=vmem, size = 0x12000, scoped, tag = 'internal scratch']
  %s0 = inlined_call_operand.hbm [shape: f32[16,128], index: 0, kind: input, shape index: {}]
  %s1 = inlined_call_operand.hbm [shape: f32[16,128], index: 1, kind: input, shape index: {}]
  %s2 = inlined_call_operand.hbm [shape: f32[16,128], index: 2, kind: output, shape index: {0}]
  %s3 = inlined_call_operand.hbm [shape: f32[16,128], index: 3, kind: output, shape index: {1}]
  %s4 = inlined_call_operand.hbm [shape: f32[16,128], index: 4, kind: output, shape index: {2}]
  %5 = xla_tuple %s2, %s3, %s4
  %s6 = sld [smem:[#allocation0]]
  $region46: #{tpu_custom_call.1} parent=0
    _
  %s8 = ssub.s32 1, %s6
  %s9 = scalar_select 0, %s8, %s6
  $region1: #{tpu_custom_call.1} parent=0
    #allocation2 [shape = 'u8[8192]{0}', space=vmem, size = 0x2000, scoped, tag = 'input window, operand 0, single buffered']
    #allocation3 [shape = 's32[1]{0}', space=sflag, size = 0x4, scoped, tag = 'scoped memory for tpu_custom_call.1']
    #allocation4 [shape = 's32[1]{0}', space=sflag, size = 0x4, scoped, tag = 'scoped memory for tpu_custom_call.1']
    #allocation5 [shape = 'u8[8192]{0}', space=vmem, size = 0x2000, scoped, tag = 'input window, operand 1, single buffered']
    #allocation6 [shape = 's32[1]{0}', space=sflag, size = 0x4, scoped, tag = 'scoped memory for tpu_custom_call.1']
    #allocation7 [shape = 'u8[8192]{0}', space=vmem, size = 0x2000, scoped, tag = 'output window, operand 0, single buffered']
    #allocation8 [shape = 'u8[8192]{0}', space=vmem, size = 0x2000, scoped, tag = 'output window, operand 1, single buffered']
    #allocation9 [shape = 's32[1]{0}', space=sflag, size = 0x4, scoped, tag = 'scoped memory for tpu_custom_call.1']
    #allocation10 [shape = 'u8[8192]{0}', space=vmem, size = 0x2000, scoped, tag = 'output window, operand 2, single buffered']
    %10 = vsyncpa [#allocation3], 0
    %11 = vsyncpa [#allocation6], 0
    %12 = vsyncpa [#allocation4], 0
    %13 = vsyncpa [#allocation9], 0
    // Predicated region
    $region2: #{tpu_custom_call.1} parent=1 // pred_check
      _
    $region3: #{tpu_custom_call.1} parent=1 // pred_check_branch
      %15 = sbr.rel (0) target = $region5
    $region4: #{tpu_custom_call.1} parent=1 // pred_region
      %s16 = sadd.s32 0, 0
      %p17 = scmp.lt.s32.totalorder %s16, 0
      %s18 = scalar_select %p17, %s16, 0
      %s19 = smul.u32 2, %s18
      %s21 = ssub.s32 256, 256
      %22 = vsyncadd [#allocation3], %s21
      %s23 = smul.addr %s19, 128
      %s24 = scalar_lea.hbm %s0, %s23
      %s25 = sshll.u32 [#allocation2], 4
      %s26 = int_to_ptr.vmem [resolvable:$true] %s25
      %31 = dma.hbm_to_vmem [thread:$0]  %s24, 256, %s26, [#allocation3], 128, 128, 8
    $region5: #{tpu_custom_call.1} parent=1 // pred_fallthru
      _
    // Predicated region
    $region6: #{tpu_custom_call.1} parent=1 // pred_check
      _
    $region7: #{tpu_custom_call.1} parent=1 // pred_check_branch
      %33 = sbr.rel (0) target = $region9
    $region8: #{tpu_custom_call.1} parent=1 // pred_region
      %s34 = sadd.s32 0, 0
      %p35 = scmp.lt.s32.totalorder %s34, 0
      %s36 = scalar_select %p35, %s34, 0
      %s37 = smul.u32 2, %s36
      %s39 = ssub.s32 256, 256
      %40 = vsyncadd [#allocation6], %s39
      %s41 = smul.addr %s37, 128
      %s42 = scalar_lea.hbm %s1, %s41
      %s43 = sshll.u32 [#allocation5], 4
      %s44 = int_to_ptr.vmem [resolvable:$true] %s43
      %49 = dma.hbm_to_vmem [thread:$0]  %s42, 256, %s44, [#allocation6], 128, 128, 8
    $region9: #{tpu_custom_call.1} parent=1 // pred_fallthru
      _
    // Predicated region
    $region10: #{tpu_custom_call.1} parent=1 // pred_check
      _
    $region11: #{tpu_custom_call.1} parent=1 // pred_check_branch
      %51 = sbr.rel (0) target = $region13
    $region12: #{tpu_custom_call.1} parent=1 // pred_region
      %52 = dma.done [#allocation3], 256
    $region13: #{tpu_custom_call.1} parent=1 // pred_fallthru
      _
    // Predicated region
    $region14: #{tpu_custom_call.1} parent=1 // pred_check
      _
    $region15: #{tpu_custom_call.1} parent=1 // pred_check_branch
      %54 = sbr.rel (0) target = $region17
    $region16: #{tpu_custom_call.1} parent=1 // pred_region
      %55 = dma.done [#allocation6], 256
    $region17: #{tpu_custom_call.1} parent=1 // pred_fallthru
      _
    %s56 = sadd.s32 0, 0
    %p57 = scmp.lt.s32.totalorder %s56, 0
    %s58 = scalar_select %p57, %s56, 0
    %s59 = smul.u32 2, %s58
    %s60 = sadd.s32 0, 0
    %p61 = scmp.lt.s32.totalorder %s60, 0
    %s62 = scalar_select %p61, %s60, 0
    %s63 = smul.u32 2, %s62
    %p64 = scmp.eq.s32.totalorder 0, 0
    // Predicated region
    $region18: #{tpu_custom_call.1} parent=1 // pred_check
      %p65 = pneg %p64
    $region19: #{tpu_custom_call.1} parent=1 // pred_check_branch
      %67 = sbr.rel (%p65) target = $region21
    $region20: #{tpu_custom_call.1} parent=1 // pred_region
      %68 = vst [vmem:[#allocation7] sm:$0xff] 0.0
      %69 = vst [vmem:[#allocation7 + $0x8] sm:$0xff] 0.0
      %70 = vst [vmem:[#allocation8] sm:$0xff] 0.0
      %71 = vst [vmem:[#allocation8 + $0x8] sm:$0xff] 0.0
      %72 = vst [vmem:[#allocation10] sm:$0xff] 0.0
      %73 = vst [vmem:[#allocation10 + $0x8] sm:$0xff] 0.0
    $region21: #{tpu_custom_call.1} parent=1 // pred_fallthru
      _
    %v74 = vld [vmem:[#allocation2] sm:$0xff]
    %v75 = vld [vmem:[#allocation2 + $0x8] sm:$0xff]
    %v76 = vld [vmem:[#allocation5] sm:$0xff]
    %v77 = vld [vmem:[#allocation5 + $0x8] sm:$0xff]
    %v78 = vld [vmem:[#allocation7] sm:$0xff]
    %v79 = vld [vmem:[#allocation7 + $0x8] sm:$0xff]
    %v80 = vmul.f32 %v74, %v76
    %v81 = vmul.f32 %v75, %v77
    %v82 = vadd.f32 %v78, %v80
    %v83 = vadd.f32 %v79, %v81
    %84 = vst [vmem:[#allocation7] sm:$0xff] %v82
    %85 = vst [vmem:[#allocation7 + $0x8] sm:$0xff] %v83
    %v86 = vld [vmem:[#allocation8] sm:$0xff]
    %v87 = vld [vmem:[#allocation8 + $0x8] sm:$0xff]
    %v88 = vadd.f32 %v86, %v74
    %v89 = vadd.f32 %v87, %v75
    %90 = vst [vmem:[#allocation8] sm:$0xff] %v88
    %91 = vst [vmem:[#allocation8 + $0x8] sm:$0xff] %v89
    %v92 = vld [vmem:[#allocation10] sm:$0xff]
    %v93 = vld [vmem:[#allocation10 + $0x8] sm:$0xff]
    %v94 = vadd.f32 %v92, %v76
    %v95 = vadd.f32 %v93, %v77
    %96 = vst [vmem:[#allocation10] sm:$0xff] %v94
    %97 = vst [vmem:[#allocation10 + $0x8] sm:$0xff] %v95
    // Predicated region
    $region22: #{tpu_custom_call.1} parent=1 // pred_check
      _
    $region23: #{tpu_custom_call.1} parent=1 // pred_check_branch
      %99 = sbr.rel (0) target = $region25
    $region24: #{tpu_custom_call.1} parent=1 // pred_region
      %s101 = ssub.s32 256, 256
      %102 = vsyncadd [#allocation4], %s101
      %s103 = sshll.u32 [#allocation7], 4
      %s104 = int_to_ptr.vmem [resolvable:$true] %s103
      %109 = dma.vmem_to_hbm [thread:$0]  %s104, 256, %s2, [#allocation4], 128, 128, 8
    $region25: #{tpu_custom_call.1} parent=1 // pred_fallthru
      _
    // Predicated region
    $region26: #{tpu_custom_call.1} parent=1 // pred_check
      _
    $region27: #{tpu_custom_call.1} parent=1 // pred_check_branch
      %111 = sbr.rel (0) target = $region29
    $region28: #{tpu_custom_call.1} parent=1 // pred_region
      %s113 = ssub.s32 256, 256
      %114 = vsyncadd [#allocation9], %s113
      %s115 = sshll.u32 [#allocation8], 4
      %s116 = int_to_ptr.vmem [resolvable:$true] %s115
      %121 = dma.vmem_to_hbm [thread:$0]  %s116, 256, %s3, [#allocation9], 128, 128, 8
    $region29: #{tpu_custom_call.1} parent=1 // pred_fallthru
      _
    // Predicated region
    $region30: #{tpu_custom_call.1} parent=1 // pred_check
      _
    $region31: #{tpu_custom_call.1} parent=1 // pred_check_branch
      %123 = sbr.rel (0) target = $region33
    $region32: #{tpu_custom_call.1} parent=1 // pred_region
      %s125 = ssub.s32 256, 256
      %126 = vsyncadd [#allocation9], %s125
      %s127 = sshll.u32 [#allocation10], 4
      %s128 = int_to_ptr.vmem [resolvable:$true] %s127
      %133 = dma.vmem_to_hbm [thread:$0]  %s128, 256, %s4, [#allocation9], 128, 128, 8
    $region33: #{tpu_custom_call.1} parent=1 // pred_fallthru
      _
    // Predicated region
    $region34: #{tpu_custom_call.1} parent=1 // pred_check
      _
    $region35: #{tpu_custom_call.1} parent=1 // pred_check_branch
      %135 = sbr.rel (0) target = $region37
    $region36: #{tpu_custom_call.1} parent=1 // pred_region
      %136 = dma.done [#allocation4], 256
    $region37: #{tpu_custom_call.1} parent=1 // pred_fallthru
      _
    // Predicated region
    $region38: #{tpu_custom_call.1} parent=1 // pred_check
      _
    $region39: #{tpu_custom_call.1} parent=1 // pred_check_branch
      %138 = sbr.rel (0) target = $region41
    $region40: #{tpu_custom_call.1} parent=1 // pred_region
      %139 = dma.done [#allocation9], 256
    $region41: #{tpu_custom_call.1} parent=1 // pred_fallthru
      _
    // Predicated region
    $region42: #{tpu_custom_call.1} parent=1 // pred_check
      _
    $region43: #{tpu_custom_call.1} parent=1 // pred_check_branch
      %141 = sbr.rel (0) target = $region45
    $region44: #{tpu_custom_call.1} parent=1 // pred_region
      %142 = dma.done [#allocation9], 256
    $region45: #{tpu_custom_call.1} parent=1 // pred_fallthru
      _
    %143 = vsyncpa [#allocation3], 1
    %144 = vsyncpa [#allocation6], 1
    %145 = vsyncpa [#allocation4], 1
    %146 = vsyncpa [#allocation9], 1

</llo_original>
